<compile_context>
chip_gen: v7x
topology: tpu7x:2x2x1
jax: 0.10.0
libtpu: 0.0.40
codegen_flags: <defaults>
</compile_context>

<pallas_src>
import functools

import jax
import jax.numpy as jnp
from jax.experimental import pallas as pl
from jax.experimental.pallas import tpu as pltpu


def _round_up(x, m):
    return ((x + m - 1) // m) * m


def decoder_mlp_kernel(x_ref, w1_ref, b1_ref, w2_ref, b2_ref,
                       w3_ref, b3_ref, w4_ref, b4_ref, out_ref):
    # x_ref: (TB, HW, C). Global average pool == sum over the sublane (HW) axis;
    # the 1/HW scale is already folded into w1. Accumulate the pool in f32.
    pooled = jnp.sum(x_ref[...], axis=1, dtype=jnp.float32)        # (TB, C)
    pooled = pooled.astype(w1_ref.dtype)

    # Linear 1 + ReLU
    h = jnp.dot(pooled, w1_ref[...], preferred_element_type=jnp.float32) + b1_ref[...]
    h = jnp.maximum(h, 0.0).astype(w2_ref.dtype)
    # Linear 2 + ReLU
    h = jnp.dot(h, w2_ref[...], preferred_element_type=jnp.float32) + b2_ref[...]
    h = jnp.maximum(h, 0.0).astype(w3_ref.dtype)
    # Linear 3 + ReLU
    h = jnp.dot(h, w3_ref[...], preferred_element_type=jnp.float32) + b3_ref[...]
    h = jnp.maximum(h, 0.0).astype(w4_ref.dtype)
    # Linear 4 (no activation); extra padded output columns are 0-weight/0-bias.
    out = jnp.dot(h, w4_ref[...], preferred_element_type=jnp.float32) + b4_ref[...]

    out_ref[...] = out.astype(out_ref.dtype)


def prepare_decoder_params(params, hw, lane_pad=128):
    """One-time prep (do this at model-load time, NOT per call):
    - transpose PyTorch (out_features, in_features) weights to (in, out)
    - fold the 1/HW average-pool scale into w1
    - reshape biases to (1, n) rows
    - zero-pad the final layer to a multiple of `lane_pad` output columns
      so the kernel's stores are lane-dense / unmasked."""
    n_out = params["w4"].shape[0]
    n_out_pad = _round_up(n_out, lane_pad)
    w4 = params["w4"].T
    b4 = params["b4"]
    if n_out_pad != n_out:
        w4 = jnp.pad(w4, ((0, 0), (0, n_out_pad - n_out)))
        b4 = jnp.pad(b4, (0, n_out_pad - n_out))
    return {
        "w1": (params["w1"].T / float(hw)).astype(params["w1"].dtype),
        "b1": params["b1"][None, :],
        "w2": params["w2"].T,
        "b2": params["b2"][None, :],
        "w3": params["w3"].T,
        "b3": params["b3"][None, :],
        "w4": w4,
        "b4": b4[None, :],
    }


@functools.partial(jax.jit, static_argnames=("n_keypoint", "tb"))
def decoder_mlp_forward(x_nchw, prepared, n_keypoint, *, tb=8):
    """x_nchw: (B, C, H, W). prepared: output of prepare_decoder_params."""
    B, C, H, W = x_nchw.shape
    HW = H * W
    n_out = n_keypoint * 2
    n_out_pad = prepared["w4"].shape[1]

    # Lane-dense pooling layout: (B, HW, C) -> pool reduces over sublanes,
    # C sits in lanes and is already the contraction dim of the first matmul.
    x = jnp.transpose(x_nchw, (0, 2, 3, 1)).reshape(B, HW, C)

    # Batch tiling: pad B up to a multiple of the tile so every block is full
    # (padded rows compute garbage that is sliced off below).
    tb = min(tb, _round_up(B, 8))
    b_pad = _round_up(B, tb)
    if b_pad != B:
        x = jnp.pad(x, ((0, b_pad - B), (0, 0), (0, 0)))
    grid = (b_pad // tb,)

    def resident(shape):
        # Same block every grid step -> stays VMEM-resident (loaded once).
        return pl.BlockSpec(shape, lambda i: (0, 0))

    out = pl.pallas_call(
        decoder_mlp_kernel,
        out_shape=jax.ShapeDtypeStruct((b_pad, n_out_pad), x_nchw.dtype),
        grid_spec=pltpu.PrefetchScalarGridSpec(
            num_scalar_prefetch=0,
            grid=grid,
            in_specs=[
                pl.BlockSpec((tb, HW, C), lambda i: (i, 0, 0)),
                resident(prepared["w1"].shape), resident(prepared["b1"].shape),
                resident(prepared["w2"].shape), resident(prepared["b2"].shape),
                resident(prepared["w3"].shape), resident(prepared["b3"].shape),
                resident(prepared["w4"].shape), resident(prepared["b4"].shape),
            ],
            out_specs=pl.BlockSpec((tb, n_out_pad), lambda i: (i, 0)),
        ),
        compiler_params=pltpu.CompilerParams(
            dimension_semantics=("parallel",)),
    )(x, prepared["w1"], prepared["b1"], prepared["w2"], prepared["b2"],
      prepared["w3"], prepared["b3"], prepared["w4"], prepared["b4"])

    return out[:B, :n_out].reshape(B, n_keypoint, 2)


def _reference(x_nchw, params, n_keypoint):
    B = x_nchw.shape[0]
    pooled = jnp.mean(x_nchw, axis=(2, 3))            # (B, C)
    h = jnp.maximum(pooled @ params["w1"].T + params["b1"], 0.0)
    h = jnp.maximum(h @ params["w2"].T + params["b2"], 0.0)
    h = jnp.maximum(h @ params["w3"].T + params["b3"], 0.0)
    out = h @ params["w4"].T + params["b4"]
    return out.reshape(B, n_keypoint, 2)


if __name__ == "__main__":
    # Small shapes consistent with the module: n_input=C, n_latent, n_keypoint.
    B, C, H, W = 2, 256, 8, 8
    n_latent, n_keypoint = 128, 21
    n_out = n_keypoint * 2

    key = jax.random.PRNGKey(0)
    kx, k1, k2, k3, k4, kb1, kb2, kb3, kb4 = jax.random.split(key, 9)

    x = jax.random.normal(kx, (B, C, H, W), dtype=jnp.float32)

    # Deterministic parameter init (PyTorch Linear weight shape: (out, in)).
    params = {
        "w1": jax.random.normal(k1, (n_latent, C), dtype=jnp.float32) * 0.02,
        "b1": jax.random.normal(kb1, (n_latent,), dtype=jnp.float32) * 0.01,
        "w2": jax.random.normal(k2, (n_latent, n_latent), dtype=jnp.float32) * 0.02,
        "b2": jax.random.normal(kb2, (n_latent,), dtype=jnp.float32) * 0.01,
        "w3": jax.random.normal(k3, (n_latent, n_latent), dtype=jnp.float32) * 0.02,
        "b3": jax.random.normal(kb3, (n_latent,), dtype=jnp.float32) * 0.01,
        "w4": jax.random.normal(k4, (n_out, n_latent), dtype=jnp.float32) * 0.02,
        "b4": jax.random.normal(kb4, (n_out,), dtype=jnp.float32) * 0.01,
    }

    prepared = prepare_decoder_params(params, hw=H * W)

    out = decoder_mlp_forward(x, prepared, n_keypoint)
    out = jax.block_until_ready(out)

    ref = _reference(x, params, n_keypoint)
    assert out.shape == (B, n_keypoint, 2), out.shape
    assert jnp.allclose(out, ref, atol=1e-4, rtol=1e-4), "mismatch vs reference"

    print("KERNEL_OK")
</pallas_src>

<mosaic_0001>
module attributes {stable_mosaic.version = 11 : i64} {
  func.func @decoder_mlp_kernel(%arg0: i32, %arg1: memref<8x64x256xf32, #tpu.memory_space<vmem>>, %arg2: memref<256x128xf32, #tpu.memory_space<vmem>>, %arg3: memref<1x128xf32, #tpu.memory_space<vmem>>, %arg4: memref<128x128xf32, #tpu.memory_space<vmem>>, %arg5: memref<1x128xf32, #tpu.memory_space<vmem>>, %arg6: memref<128x128xf32, #tpu.memory_space<vmem>>, %arg7: memref<1x128xf32, #tpu.memory_space<vmem>>, %arg8: memref<128x128xf32, #tpu.memory_space<vmem>>, %arg9: memref<1x128xf32, #tpu.memory_space<vmem>>, %arg10: memref<8x128xf32, #tpu.memory_space<vmem>>) attributes {dimension_semantics = [#tpu.dimension_semantics<parallel>], iteration_bounds = array<i64: 1>, scalar_prefetch = 0 : i64, scratch_operands = 0 : i64, tpu.core_type = #tpu.core_type<tc>, window_params = [{transform_indices = @transform_0, window_bounds = array<i64: 8, 64, 256>}, {pipeline_mode = #tpu.pipeline_mode<synchronous>, transform_indices = @transform_1, window_bounds = array<i64: 256, 128>}, {pipeline_mode = #tpu.pipeline_mode<synchronous>, transform_indices = @transform_2, window_bounds = array<i64: 1, 128>}, {pipeline_mode = #tpu.pipeline_mode<synchronous>, transform_indices = @transform_3, window_bounds = array<i64: 128, 128>}, {pipeline_mode = #tpu.pipeline_mode<synchronous>, transform_indices = @transform_4, window_bounds = array<i64: 1, 128>}, {pipeline_mode = #tpu.pipeline_mode<synchronous>, transform_indices = @transform_5, window_bounds = array<i64: 128, 128>}, {pipeline_mode = #tpu.pipeline_mode<synchronous>, transform_indices = @transform_6, window_bounds = array<i64: 1, 128>}, {pipeline_mode = #tpu.pipeline_mode<synchronous>, transform_indices = @transform_7, window_bounds = array<i64: 128, 128>}, {pipeline_mode = #tpu.pipeline_mode<synchronous>, transform_indices = @transform_8, window_bounds = array<i64: 1, 128>}, {transform_indices = @transform_9, window_bounds = array<i64: 8, 128>}]} {
    %c0 = arith.constant 0 : index
    %c0_0 = arith.constant 0 : index
    %c0_1 = arith.constant 0 : index
    %0 = vector.load %arg1[%c0, %c0_0, %c0_1] : memref<8x64x256xf32, #tpu.memory_space<vmem>>, vector<8x64x256xf32>
    %cst = arith.constant dense<0.000000e+00> : vector<8x256xf32>
    %1 = vector.multi_reduction <add>, %0, %cst [1] : vector<8x64x256xf32> to vector<8x256xf32>
    %c0_2 = arith.constant 0 : index
    %c0_3 = arith.constant 0 : index
    %2 = vector.load %arg2[%c0_2, %c0_3] : memref<256x128xf32, #tpu.memory_space<vmem>>, vector<256x128xf32>
    %cst_4 = arith.constant dense<0.000000e+00> : vector<8x128xf32>
    %3 = tpu.matmul %1, %2, %cst_4 {dimension_numbers = #tpu.dot_dimension_numbers<[1], [0], [0], [1], [0, 0, 1, 1], [], []>} : vector<8x256xf32>, vector<256x128xf32>, vector<8x128xf32> -> vector<8x128xf32>
    %c0_5 = arith.constant 0 : index
    %c0_6 = arith.constant 0 : index
    %4 = vector.load %arg3[%c0_5, %c0_6] : memref<1x128xf32, #tpu.memory_space<vmem>>, vector<1x128xf32>
    %5 = vector.broadcast %4 : vector<1x128xf32> to vector<8x128xf32>
    %6 = arith.addf %3, %5 : vector<8x128xf32>
    %cst_7 = arith.constant 0.000000e+00 : f32
    %7 = vector.broadcast %cst_7 : f32 to vector<8x128xf32>
    %8 = arith.maximumf %6, %7 : vector<8x128xf32>
    %c0_8 = arith.constant 0 : index
    %c0_9 = arith.constant 0 : index
    %9 = vector.load %arg4[%c0_8, %c0_9] : memref<128x128xf32, #tpu.memory_space<vmem>>, vector<128x128xf32>
    %cst_10 = arith.constant dense<0.000000e+00> : vector<8x128xf32>
    %10 = tpu.matmul %8, %9, %cst_10 {dimension_numbers = #tpu.dot_dimension_numbers<[1], [0], [0], [1], [0, 0, 1, 1], [], []>} : vector<8x128xf32>, vector<128x128xf32>, vector<8x128xf32> -> vector<8x128xf32>
    %c0_11 = arith.constant 0 : index
    %c0_12 = arith.constant 0 : index
    %11 = vector.load %arg5[%c0_11, %c0_12] : memref<1x128xf32, #tpu.memory_space<vmem>>, vector<1x128xf32>
    %12 = vector.broadcast %11 : vector<1x128xf32> to vector<8x128xf32>
    %13 = arith.addf %10, %12 : vector<8x128xf32>
    %cst_13 = arith.constant 0.000000e+00 : f32
    %14 = vector.broadcast %cst_13 : f32 to vector<8x128xf32>
    %15 = arith.maximumf %13, %14 : vector<8x128xf32>
    %c0_14 = arith.constant 0 : index
    %c0_15 = arith.constant 0 : index
    %16 = vector.load %arg6[%c0_14, %c0_15] : memref<128x128xf32, #tpu.memory_space<vmem>>, vector<128x128xf32>
    %cst_16 = arith.constant dense<0.000000e+00> : vector<8x128xf32>
    %17 = tpu.matmul %15, %16, %cst_16 {dimension_numbers = #tpu.dot_dimension_numbers<[1], [0], [0], [1], [0, 0, 1, 1], [], []>} : vector<8x128xf32>, vector<128x128xf32>, vector<8x128xf32> -> vector<8x128xf32>
    %c0_17 = arith.constant 0 : index
    %c0_18 = arith.constant 0 : index
    %18 = vector.load %arg7[%c0_17, %c0_18] : memref<1x128xf32, #tpu.memory_space<vmem>>, vector<1x128xf32>
    %19 = vector.broadcast %18 : vector<1x128xf32> to vector<8x128xf32>
    %20 = arith.addf %17, %19 : vector<8x128xf32>
    %cst_19 = arith.constant 0.000000e+00 : f32
    %21 = vector.broadcast %cst_19 : f32 to vector<8x128xf32>
    %22 = arith.maximumf %20, %21 : vector<8x128xf32>
    %c0_20 = arith.constant 0 : index
    %c0_21 = arith.constant 0 : index
    %23 = vector.load %arg8[%c0_20, %c0_21] : memref<128x128xf32, #tpu.memory_space<vmem>>, vector<128x128xf32>
    %cst_22 = arith.constant dense<0.000000e+00> : vector<8x128xf32>
    %24 = tpu.matmul %22, %23, %cst_22 {dimension_numbers = #tpu.dot_dimension_numbers<[1], [0], [0], [1], [0, 0, 1, 1], [], []>} : vector<8x128xf32>, vector<128x128xf32>, vector<8x128xf32> -> vector<8x128xf32>
    %c0_23 = arith.constant 0 : index
    %c0_24 = arith.constant 0 : index
    %25 = vector.load %arg9[%c0_23, %c0_24] : memref<1x128xf32, #tpu.memory_space<vmem>>, vector<1x128xf32>
    %26 = vector.broadcast %25 : vector<1x128xf32> to vector<8x128xf32>
    %27 = arith.addf %24, %26 : vector<8x128xf32>
    %c0_25 = arith.constant 0 : index
    %c0_26 = arith.constant 0 : index
    %28 = vector.load %arg10[%c0_25, %c0_26] : memref<8x128xf32, #tpu.memory_space<vmem>>, vector<8x128xf32>
    tpu.vector_store %arg10[%c0_25, %c0_26], %27 {strides = array<i32>} : memref<8x128xf32, #tpu.memory_space<vmem>>, vector<8x128xf32>,
    return
  }
  func.func @transform_0(%arg0: i32) -> (i32, i32, i32) {
    %c0_i32 = arith.constant 0 : i32
    %c0_i32_0 = arith.constant 0 : i32
    %c0_i32_1 = arith.constant 0 : i32
    return %arg0, %c0_i32, %c0_i32_0 : i32, i32, i32
  }
  func.func @transform_1(%arg0: i32) -> (i32, i32) {
    %c0_i32 = arith.constant 0 : i32
    %c0_i32_0 = arith.constant 0 : i32
    %c0_i32_1 = arith.constant 0 : i32
    return %c0_i32, %c0_i32_0 : i32, i32
  }
  func.func @transform_2(%arg0: i32) -> (i32, i32) {
    %c0_i32 = arith.constant 0 : i32
    %c0_i32_0 = arith.constant 0 : i32
    %c0_i32_1 = arith.constant 0 : i32
    return %c0_i32, %c0_i32_0 : i32, i32
  }
  func.func @transform_3(%arg0: i32) -> (i32, i32) {
    %c0_i32 = arith.constant 0 : i32
    %c0_i32_0 = arith.constant 0 : i32
    %c0_i32_1 = arith.constant 0 : i32
    return %c0_i32, %c0_i32_0 : i32, i32
  }
  func.func @transform_4(%arg0: i32) -> (i32, i32) {
    %c0_i32 = arith.constant 0 : i32
    %c0_i32_0 = arith.constant 0 : i32
    %c0_i32_1 = arith.constant 0 : i32
    return %c0_i32, %c0_i32_0 : i32, i32
  }
  func.func @transform_5(%arg0: i32) -> (i32, i32) {
    %c0_i32 = arith.constant 0 : i32
    %c0_i32_0 = arith.constant 0 : i32
    %c0_i32_1 = arith.constant 0 : i32
    return %c0_i32, %c0_i32_0 : i32, i32
  }
  func.func @transform_6(%arg0: i32) -> (i32, i32) {
    %c0_i32 = arith.constant 0 : i32
    %c0_i32_0 = arith.constant 0 : i32
    %c0_i32_1 = arith.constant 0 : i32
    return %c0_i32, %c0_i32_0 : i32, i32
  }
  func.func @transform_7(%arg0: i32) -> (i32, i32) {
    %c0_i32 = arith.constant 0 : i32
    %c0_i32_0 = arith.constant 0 : i32
    %c0_i32_1 = arith.constant 0 : i32
    return %c0_i32, %c0_i32_0 : i32, i32
  }
  func.func @transform_8(%arg0: i32) -> (i32, i32) {
    %c0_i32 = arith.constant 0 : i32
    %c0_i32_0 = arith.constant 0 : i32
    %c0_i32_1 = arith.constant 0 : i32
    return %c0_i32, %c0_i32_0 : i32, i32
  }
  func.func @transform_9(%arg0: i32) -> (i32, i32) {
    %c0_i32 = arith.constant 0 : i32
    %c0_i32_0 = arith.constant 0 : i32
    return %arg0, %c0_i32 : i32, i32
  }
}

</mosaic_0001>

<llo_original>
// kernel: decoder_mlp_forward.1
$region0: #{decoder_mlp_forward.1}
  #allocation0 [shape = 'u32[]', space=smem, size = 0x4, offset = 0x4, fixed_abs, tag = 'smem constant byte address 0x4 - core index']
  #allocation1 [shape = 'u32[144,128]{1,0:T(1,128)}', space=vmem, size = 0x12000, scoped, tag = 'internal scratch']
  %s0 = inlined_call_operand.vmem [shape: f32[8,64,256], index: 0, kind: input, shape index: {}]
  %s1 = inlined_call_operand.vmem [shape: f32[256,128], index: 1, kind: input, shape index: {}]
  %s2 = inlined_call_operand.vmem [shape: f32[1,128], index: 2, kind: input, shape index: {}]
  %s3 = inlined_call_operand.vmem [shape: f32[128,128], index: 3, kind: input, shape index: {}]
  %s4 = inlined_call_operand.vmem [shape: f32[1,128], index: 4, kind: input, shape index: {}]
  %s5 = inlined_call_operand.vmem [shape: f32[128,128], index: 5, kind: input, shape index: {}]
  %s6 = inlined_call_operand.vmem [shape: f32[1,128], index: 6, kind: input, shape index: {}]
  %s7 = inlined_call_operand.vmem [shape: f32[128,128], index: 7, kind: input, shape index: {}]
  %s8 = inlined_call_operand.vmem [shape: f32[1,128], index: 8, kind: input, shape index: {}]
  %s9 = inlined_call_operand.vmem [shape: f32[8,128], index: 9, kind: output, shape index: {}]
  %s10 = sld [smem:[#allocation0]]
  $region46: #{decoder_mlp_forward.1} parent=0
    _
  %s12 = ssub.s32 1, %s10
  %s13 = scalar_select 0, %s12, %s10
  // Predicated region
  $region2: #{decoder_mlp_forward.1} parent=0 // pred_check
    _
  $region3: #{decoder_mlp_forward.1} parent=0 // pred_check_branch
    %15 = sbr.rel (0) target = $region5
  $region4: #{decoder_mlp_forward.1} parent=0 // pred_region
    _
  $region5: #{decoder_mlp_forward.1} parent=0 // pred_fallthru
    _
  // Predicated region
  $region6: #{decoder_mlp_forward.1} parent=0 // pred_check
    _
  $region7: #{decoder_mlp_forward.1} parent=0 // pred_check_branch
    %17 = sbr.rel (0) target = $region9
  $region8: #{decoder_mlp_forward.1} parent=0 // pred_region
    _
  $region9: #{decoder_mlp_forward.1} parent=0 // pred_fallthru
    _
  // Predicated region
  $region10: #{decoder_mlp_forward.1} parent=0 // pred_check
    _
  $region11: #{decoder_mlp_forward.1} parent=0 // pred_check_branch
    %19 = sbr.rel (0) target = $region13
  $region12: #{decoder_mlp_forward.1} parent=0 // pred_region
    _
  $region13: #{decoder_mlp_forward.1} parent=0 // pred_fallthru
    _
  // Predicated region
  $region14: #{decoder_mlp_forward.1} parent=0 // pred_check
    _
  $region15: #{decoder_mlp_forward.1} parent=0 // pred_check_branch
    %21 = sbr.rel (0) target = $region17
  $region16: #{decoder_mlp_forward.1} parent=0 // pred_region
    _
  $region17: #{decoder_mlp_forward.1} parent=0 // pred_fallthru
    _
  // Predicated region
  $region18: #{decoder_mlp_forward.1} parent=0 // pred_check
    _
  $region19: #{decoder_mlp_forward.1} parent=0 // pred_check_branch
    %23 = sbr.rel (0) target = $region21
  $region20: #{decoder_mlp_forward.1} parent=0 // pred_region
    _
  $region21: #{decoder_mlp_forward.1} parent=0 // pred_fallthru
    _
  // Predicated region
  $region22: #{decoder_mlp_forward.1} parent=0 // pred_check
    _
  $region23: #{decoder_mlp_forward.1} parent=0 // pred_check_branch
    %25 = sbr.rel (0) target = $region25
  $region24: #{decoder_mlp_forward.1} parent=0 // pred_region
    _
  $region25: #{decoder_mlp_forward.1} parent=0 // pred_fallthru
    _
  // Predicated region
  $region26: #{decoder_mlp_forward.1} parent=0 // pred_check
    _
  $region27: #{decoder_mlp_forward.1} parent=0 // pred_check_branch
    %27 = sbr.rel (0) target = $region29
  $region28: #{decoder_mlp_forward.1} parent=0 // pred_region
    _
  $region29: #{decoder_mlp_forward.1} parent=0 // pred_fallthru
    _
  // Predicated region
  $region30: #{decoder_mlp_forward.1} parent=0 // pred_check
    _
  $region31: #{decoder_mlp_forward.1} parent=0 // pred_check_branch
    %29 = sbr.rel (0) target = $region33
  $region32: #{decoder_mlp_forward.1} parent=0 // pred_region
    _
  $region33: #{decoder_mlp_forward.1} parent=0 // pred_fallthru
    _
  // Predicated region
  $region34: #{decoder_mlp_forward.1} parent=0 // pred_check
    _
  $region35: #{decoder_mlp_forward.1} parent=0 // pred_check_branch
    %31 = sbr.rel (0) target = $region37
  $region36: #{decoder_mlp_forward.1} parent=0 // pred_region
    _
  $region37: #{decoder_mlp_forward.1} parent=0 // pred_fallthru
    _
  %v32 = vld [vmem:[%s0] sm:$0xff]
  %v33 = vld [vmem:[%s0 + $0x8] sm:$0xff]
  %v34 = vld [vmem:[%s0 + $0x10] sm:$0xff]
  %v35 = vld [vmem:[%s0 + $0x18] sm:$0xff]
  %v36 = vld [vmem:[%s0 + $0x20] sm:$0xff]
  %v37 = vld [vmem:[%s0 + $0x28] sm:$0xff]
  %v38 = vld [vmem:[%s0 + $0x30] sm:$0xff]
  %v39 = vld [vmem:[%s0 + $0x38] sm:$0xff]
  %v40 = vld [vmem:[%s0 + $0x40] sm:$0xff]
  %v41 = vld [vmem:[%s0 + $0x48] sm:$0xff]
  %v42 = vld [vmem:[%s0 + $0x50] sm:$0xff]
  %v43 = vld [vmem:[%s0 + $0x58] sm:$0xff]
  %v44 = vld [vmem:[%s0 + $0x60] sm:$0xff]
  %v45 = vld [vmem:[%s0 + $0x68] sm:$0xff]
  %v46 = vld [vmem:[%s0 + $0x70] sm:$0xff]
  %v47 = vld [vmem:[%s0 + $0x78] sm:$0xff]
  %v48 = vld [vmem:[%s0 + $0x80] sm:$0xff]
  %v49 = vld [vmem:[%s0 + $0x88] sm:$0xff]
  %v50 = vld [vmem:[%s0 + $0x90] sm:$0xff]
  %v51 = vld [vmem:[%s0 + $0x98] sm:$0xff]
  %v52 = vld [vmem:[%s0 + $0xa0] sm:$0xff]
  %v53 = vld [vmem:[%s0 + $0xa8] sm:$0xff]
  %v54 = vld [vmem:[%s0 + $0xb0] sm:$0xff]
  %v55 = vld [vmem:[%s0 + $0xb8] sm:$0xff]
  %v56 = vld [vmem:[%s0 + $0xc0] sm:$0xff]
  %v57 = vld [vmem:[%s0 + $0xc8] sm:$0xff]
  %v58 = vld [vmem:[%s0 + $0xd0] sm:$0xff]
  %v59 = vld [vmem:[%s0 + $0xd8] sm:$0xff]
  %v60 = vld [vmem:[%s0 + $0xe0] sm:$0xff]
  %v61 = vld [vmem:[%s0 + $0xe8] sm:$0xff]
  %v62 = vld [vmem:[%s0 + $0xf0] sm:$0xff]
  %v63 = vld [vmem:[%s0 + $0xf8] sm:$0xff]
  %v64 = vld [vmem:[%s0 + $0x100] sm:$0xff]
  %v65 = vld [vmem:[%s0 + $0x108] sm:$0xff]
  %v66 = vld [vmem:[%s0 + $0x110] sm:$0xff]
  %v67 = vld [vmem:[%s0 + $0x118] sm:$0xff]
  %v68 = vld [vmem:[%s0 + $0x120] sm:$0xff]
  %v69 = vld [vmem:[%s0 + $0x128] sm:$0xff]
  %v70 = vld [vmem:[%s0 + $0x130] sm:$0xff]
  %v71 = vld [vmem:[%s0 + $0x138] sm:$0xff]
  %v72 = vld [vmem:[%s0 + $0x140] sm:$0xff]
  %v73 = vld [vmem:[%s0 + $0x148] sm:$0xff]
  %v74 = vld [vmem:[%s0 + $0x150] sm:$0xff]
  %v75 = vld [vmem:[%s0 + $0x158] sm:$0xff]
  %v76 = vld [vmem:[%s0 + $0x160] sm:$0xff]
  %v77 = vld [vmem:[%s0 + $0x168] sm:$0xff]
  %v78 = vld [vmem:[%s0 + $0x170] sm:$0xff]
  %v79 = vld [vmem:[%s0 + $0x178] sm:$0xff]
  %v80 = vld [vmem:[%s0 + $0x180] sm:$0xff]
  %v81 = vld [vmem:[%s0 + $0x188] sm:$0xff]
  %v82 = vld [vmem:[%s0 + $0x190] sm:$0xff]
  %v83 = vld [vmem:[%s0 + $0x198] sm:$0xff]
  %v84 = vld [vmem:[%s0 + $0x1a0] sm:$0xff]
  %v85 = vld [vmem:[%s0 + $0x1a8] sm:$0xff]
  %v86 = vld [vmem:[%s0 + $0x1b0] sm:$0xff]
  %v87 = vld [vmem:[%s0 + $0x1b8] sm:$0xff]
  %v88 = vld [vmem:[%s0 + $0x1c0] sm:$0xff]
  %v89 = vld [vmem:[%s0 + $0x1c8] sm:$0xff]
  %v90 = vld [vmem:[%s0 + $0x1d0] sm:$0xff]
  %v91 = vld [vmem:[%s0 + $0x1d8] sm:$0xff]
  %v92 = vld [vmem:[%s0 + $0x1e0] sm:$0xff]
  %v93 = vld [vmem:[%s0 + $0x1e8] sm:$0xff]
  %v94 = vld [vmem:[%s0 + $0x1f0] sm:$0xff]
  %v95 = vld [vmem:[%s0 + $0x1f8] sm:$0xff]
  %v96 = vld [vmem:[%s0 + $0x200] sm:$0xff]
  %v97 = vld [vmem:[%s0 + $0x208] sm:$0xff]
  %v98 = vld [vmem:[%s0 + $0x210] sm:$0xff]
  %v99 = vld [vmem:[%s0 + $0x218] sm:$0xff]
  %v100 = vld [vmem:[%s0 + $0x220] sm:$0xff]
  %v101 = vld [vmem:[%s0 + $0x228] sm:$0xff]
  %v102 = vld [vmem:[%s0 + $0x230] sm:$0xff]
  %v103 = vld [vmem:[%s0 + $0x238] sm:$0xff]
  %v104 = vld [vmem:[%s0 + $0x240] sm:$0xff]
  %v105 = vld [vmem:[%s0 + $0x248] sm:$0xff]
  %v106 = vld [vmem:[%s0 + $0x250] sm:$0xff]
  %v107 = vld [vmem:[%s0 + $0x258] sm:$0xff]
  %v108 = vld [vmem:[%s0 + $0x260] sm:$0xff]
  %v109 = vld [vmem:[%s0 + $0x268] sm:$0xff]
  %v110 = vld [vmem:[%s0 + $0x270] sm:$0xff]
  %v111 = vld [vmem:[%s0 + $0x278] sm:$0xff]
  %v112 = vld [vmem:[%s0 + $0x280] sm:$0xff]
  %v113 = vld [vmem:[%s0 + $0x288] sm:$0xff]
  %v114 = vld [vmem:[%s0 + $0x290] sm:$0xff]
  %v115 = vld [vmem:[%s0 + $0x298] sm:$0xff]
  %v116 = vld [vmem:[%s0 + $0x2a0] sm:$0xff]
  %v117 = vld [vmem:[%s0 + $0x2a8] sm:$0xff]
  %v118 = vld [vmem:[%s0 + $0x2b0] sm:$0xff]
  %v119 = vld [vmem:[%s0 + $0x2b8] sm:$0xff]
  %v120 = vld [vmem:[%s0 + $0x2c0] sm:$0xff]
  %v121 = vld [vmem:[%s0 + $0x2c8] sm:$0xff]
  %v122 = vld [vmem:[%s0 + $0x2d0] sm:$0xff]
  %v123 = vld [vmem:[%s0 + $0x2d8] sm:$0xff]
  %v124 = vld [vmem:[%s0 + $0x2e0] sm:$0xff]
  %v125 = vld [vmem:[%s0 + $0x2e8] sm:$0xff]
  %v126 = vld [vmem:[%s0 + $0x2f0] sm:$0xff]
  %v127 = vld [vmem:[%s0 + $0x2f8] sm:$0xff]
  %v128 = vld [vmem:[%s0 + $0x300] sm:$0xff]
  %v129 = vld [vmem:[%s0 + $0x308] sm:$0xff]
  %v130 = vld [vmem:[%s0 + $0x310] sm:$0xff]
  %v131 = vld [vmem:[%s0 + $0x318] sm:$0xff]
  %v132 = vld [vmem:[%s0 + $0x320] sm:$0xff]
  %v133 = vld [vmem:[%s0 + $0x328] sm:$0xff]
  %v134 = vld [vmem:[%s0 + $0x330] sm:$0xff]
  %v135 = vld [vmem:[%s0 + $0x338] sm:$0xff]
  %v136 = vld [vmem:[%s0 + $0x340] sm:$0xff]
  %v137 = vld [vmem:[%s0 + $0x348] sm:$0xff]
  %v138 = vld [vmem:[%s0 + $0x350] sm:$0xff]
  %v139 = vld [vmem:[%s0 + $0x358] sm:$0xff]
  %v140 = vld [vmem:[%s0 + $0x360] sm:$0xff]
  %v141 = vld [vmem:[%s0 + $0x368] sm:$0xff]
  %v142 = vld [vmem:[%s0 + $0x370] sm:$0xff]
  %v143 = vld [vmem:[%s0 + $0x378] sm:$0xff]
  %v144 = vld [vmem:[%s0 + $0x380] sm:$0xff]
  %v145 = vld [vmem:[%s0 + $0x388] sm:$0xff]
  %v146 = vld [vmem:[%s0 + $0x390] sm:$0xff]
  %v147 = vld [vmem:[%s0 + $0x398] sm:$0xff]
  %v148 = vld [vmem:[%s0 + $0x3a0] sm:$0xff]
  %v149 = vld [vmem:[%s0 + $0x3a8] sm:$0xff]
  %v150 = vld [vmem:[%s0 + $0x3b0] sm:$0xff]
  %v151 = vld [vmem:[%s0 + $0x3b8] sm:$0xff]
  %v152 = vld [vmem:[%s0 + $0x3c0] sm:$0xff]
  %v153 = vld [vmem:[%s0 + $0x3c8] sm:$0xff]
  %v154 = vld [vmem:[%s0 + $0x3d0] sm:$0xff]
  %v155 = vld [vmem:[%s0 + $0x3d8] sm:$0xff]
  %v156 = vld [vmem:[%s0 + $0x3e0] sm:$0xff]
  %v157 = vld [vmem:[%s0 + $0x3e8] sm:$0xff]
  %v158 = vld [vmem:[%s0 + $0x3f0] sm:$0xff]
  %v159 = vld [vmem:[%s0 + $0x3f8] sm:$0xff]
  %v160 = vadd.f32 %v32, %v34
  %v161 = vadd.f32 %v160, %v36
  %v162 = vadd.f32 %v161, %v38
  %v163 = vadd.f32 %v162, %v40
  %v164 = vadd.f32 %v163, %v42
  %v165 = vadd.f32 %v164, %v44
  %v166 = vadd.f32 %v165, %v46
  %v167 = vrot.slane %v166, 4
  %v168 = vadd.f32 %v166, %v167
  %v169 = vrot.slane %v168, 2
  %v170 = vadd.f32 %v168, %v169
  %v171 = vrot.slane %v170, 1
  %v172 = vadd.f32 %v170, %v171
  %v173 = vadd.f32 %v33, %v35
  %v174 = vadd.f32 %v173, %v37
  %v175 = vadd.f32 %v174, %v39
  %v176 = vadd.f32 %v175, %v41
  %v177 = vadd.f32 %v176, %v43
  %v178 = vadd.f32 %v177, %v45
  %v179 = vadd.f32 %v178, %v47
  %v180 = vrot.slane %v179, 4
  %v181 = vadd.f32 %v179, %v180
  %v182 = vrot.slane %v181, 2
  %v183 = vadd.f32 %v181, %v182
  %v184 = vrot.slane %v183, 1
  %v185 = vadd.f32 %v183, %v184
  %v186 = vadd.f32 %v48, %v50
  %v187 = vadd.f32 %v186, %v52
  %v188 = vadd.f32 %v187, %v54
  %v189 = vadd.f32 %v188, %v56
  %v190 = vadd.f32 %v189, %v58
  %v191 = vadd.f32 %v190, %v60
  %v192 = vadd.f32 %v191, %v62
  %v193 = vrot.slane %v192, 4
  %v194 = vadd.f32 %v192, %v193
  %v195 = vrot.slane %v194, 2
  %v196 = vadd.f32 %v194, %v195
  %v197 = vrot.slane %v196, 1
  %v198 = vadd.f32 %v196, %v197
  %v199 = vadd.f32 %v49, %v51
  %v200 = vadd.f32 %v199, %v53
  %v201 = vadd.f32 %v200, %v55
  %v202 = vadd.f32 %v201, %v57
  %v203 = vadd.f32 %v202, %v59
  %v204 = vadd.f32 %v203, %v61
  %v205 = vadd.f32 %v204, %v63
  %v206 = vrot.slane %v205, 4
  %v207 = vadd.f32 %v205, %v206
  %v208 = vrot.slane %v207, 2
  %v209 = vadd.f32 %v207, %v208
  %v210 = vrot.slane %v209, 1
  %v211 = vadd.f32 %v209, %v210
  %v212 = vadd.f32 %v64, %v66
  %v213 = vadd.f32 %v212, %v68
  %v214 = vadd.f32 %v213, %v70
  %v215 = vadd.f32 %v214, %v72
  %v216 = vadd.f32 %v215, %v74
  %v217 = vadd.f32 %v216, %v76
  %v218 = vadd.f32 %v217, %v78
  %v219 = vrot.slane %v218, 4
  %v220 = vadd.f32 %v218, %v219
  %v221 = vrot.slane %v220, 2
  %v222 = vadd.f32 %v220, %v221
  %v223 = vrot.slane %v222, 1
  %v224 = vadd.f32 %v222, %v223
  %v225 = vadd.f32 %v65, %v67
  %v226 = vadd.f32 %v225, %v69
  %v227 = vadd.f32 %v226, %v71
  %v228 = vadd.f32 %v227, %v73
  %v229 = vadd.f32 %v228, %v75
  %v230 = vadd.f32 %v229, %v77
  %v231 = vadd.f32 %v230, %v79
  %v232 = vrot.slane %v231, 4
  %v233 = vadd.f32 %v231, %v232
  %v234 = vrot.slane %v233, 2
  %v235 = vadd.f32 %v233, %v234
  %v236 = vrot.slane %v235, 1
  %v237 = vadd.f32 %v235, %v236
  %v238 = vadd.f32 %v80, %v82
  %v239 = vadd.f32 %v238, %v84
  %v240 = vadd.f32 %v239, %v86
  %v241 = vadd.f32 %v240, %v88
  %v242 = vadd.f32 %v241, %v90
  %v243 = vadd.f32 %v242, %v92
  %v244 = vadd.f32 %v243, %v94
  %v245 = vrot.slane %v244, 4
  %v246 = vadd.f32 %v244, %v245
  %v247 = vrot.slane %v246, 2
  %v248 = vadd.f32 %v246, %v247
  %v249 = vrot.slane %v248, 1
  %v250 = vadd.f32 %v248, %v249
  %v251 = vadd.f32 %v81, %v83
  %v252 = vadd.f32 %v251, %v85
  %v253 = vadd.f32 %v252, %v87
  %v254 = vadd.f32 %v253, %v89
  %v255 = vadd.f32 %v254, %v91
  %v256 = vadd.f32 %v255, %v93
  %v257 = vadd.f32 %v256, %v95
  %v258 = vrot.slane %v257, 4
  %v259 = vadd.f32 %v257, %v258
  %v260 = vrot.slane %v259, 2
  %v261 = vadd.f32 %v259, %v260
  %v262 = vrot.slane %v261, 1
  %v263 = vadd.f32 %v261, %v262
  %v264 = vadd.f32 %v96, %v98
  %v265 = vadd.f32 %v264, %v100
  %v266 = vadd.f32 %v265, %v102
  %v267 = vadd.f32 %v266, %v104
  %v268 = vadd.f32 %v267, %v106
  %v269 = vadd.f32 %v268, %v108
  %v270 = vadd.f32 %v269, %v110
  %v271 = vrot.slane %v270, 4
  %v272 = vadd.f32 %v270, %v271
  %v273 = vrot.slane %v272, 2
  %v274 = vadd.f32 %v272, %v273
  %v275 = vrot.slane %v274, 1
  %v276 = vadd.f32 %v274, %v275
  %v277 = vadd.f32 %v97, %v99
  %v278 = vadd.f32 %v277, %v101
  %v279 = vadd.f32 %v278, %v103
  %v280 = vadd.f32 %v279, %v105
  %v281 = vadd.f32 %v280, %v107
  %v282 = vadd.f32 %v281, %v109
  %v283 = vadd.f32 %v282, %v111
  %v284 = vrot.slane %v283, 4
  %v285 = vadd.f32 %v283, %v284
  %v286 = vrot.slane %v285, 2
  %v287 = vadd.f32 %v285, %v286
  %v288 = vrot.slane %v287, 1
  %v289 = vadd.f32 %v287, %v288
  %v290 = vadd.f32 %v112, %v114
  %v291 = vadd.f32 %v290, %v116
  %v292 = vadd.f32 %v291, %v118
  %v293 = vadd.f32 %v292, %v120
  %v294 = vadd.f32 %v293, %v122
  %v295 = vadd.f32 %v294, %v124
  %v296 = vadd.f32 %v295, %v126
  %v297 = vrot.slane %v296, 4
  %v298 = vadd.f32 %v296, %v297
  %v299 = vrot.slane %v298, 2
  %v300 = vadd.f32 %v298, %v299
  %v301 = vrot.slane %v300, 1
  %v302 = vadd.f32 %v300, %v301
  %v303 = vadd.f32 %v113, %v115
  %v304 = vadd.f32 %v303, %v117
  %v305 = vadd.f32 %v304, %v119
  %v306 = vadd.f32 %v305, %v121
  %v307 = vadd.f32 %v306, %v123
  %v308 = vadd.f32 %v307, %v125
  %v309 = vadd.f32 %v308, %v127
  %v310 = vrot.slane %v309, 4
  %v311 = vadd.f32 %v309, %v310
  %v312 = vrot.slane %v311, 2
  %v313 = vadd.f32 %v311, %v312
  %v314 = vrot.slane %v313, 1
  %v315 = vadd.f32 %v313, %v314
  %v316 = vadd.f32 %v128, %v130
  %v317 = vadd.f32 %v316, %v132
  %v318 = vadd.f32 %v317, %v134
  %v319 = vadd.f32 %v318, %v136
  %v320 = vadd.f32 %v319, %v138
  %v321 = vadd.f32 %v320, %v140
  %v322 = vadd.f32 %v321, %v142
  %v323 = vrot.slane %v322, 4
  %v324 = vadd.f32 %v322, %v323
  %v325 = vrot.slane %v324, 2
  %v326 = vadd.f32 %v324, %v325
  %v327 = vrot.slane %v326, 1
  %v328 = vadd.f32 %v326, %v327
  %v329 = vadd.f32 %v129, %v131
  %v330 = vadd.f32 %v329, %v133
  %v331 = vadd.f32 %v330, %v135
  %v332 = vadd.f32 %v331, %v137
  %v333 = vadd.f32 %v332, %v139
  %v334 = vadd.f32 %v333, %v141
  %v335 = vadd.f32 %v334, %v143
  %v336 = vrot.slane %v335, 4
  %v337 = vadd.f32 %v335, %v336
  %v338 = vrot.slane %v337, 2
  %v339 = vadd.f32 %v337, %v338
  %v340 = vrot.slane %v339, 1
  %v341 = vadd.f32 %v339, %v340
  %v342 = vadd.f32 %v144, %v146
  %v343 = vadd.f32 %v342, %v148
  %v344 = vadd.f32 %v343, %v150
  %v345 = vadd.f32 %v344, %v152
  %v346 = vadd.f32 %v345, %v154
  %v347 = vadd.f32 %v346, %v156
  %v348 = vadd.f32 %v347, %v158
  %v349 = vrot.slane %v348, 4
  %v350 = vadd.f32 %v348, %v349
  %v351 = vrot.slane %v350, 2
  %v352 = vadd.f32 %v350, %v351
  %v353 = vrot.slane %v352, 1
  %v354 = vadd.f32 %v352, %v353
  %v355 = vadd.f32 %v145, %v147
  %v356 = vadd.f32 %v355, %v149
  %v357 = vadd.f32 %v356, %v151
  %v358 = vadd.f32 %v357, %v153
  %v359 = vadd.f32 %v358, %v155
  %v360 = vadd.f32 %v359, %v157
  %v361 = vadd.f32 %v360, %v159
  %v362 = vrot.slane %v361, 4
  %v363 = vadd.f32 %v361, %v362
  %v364 = vrot.slane %v363, 2
  %v365 = vadd.f32 %v363, %v364
  %v366 = vrot.slane %v365, 1
  %v367 = vadd.f32 %v365, %v366
  %v368 = vld [vmem:[%s1] sm:$0xff]
  %v369 = vld [vmem:[%s1 + $0x8] sm:$0xff]
  %v370 = vld [vmem:[%s1 + $0x10] sm:$0xff]
  %v371 = vld [vmem:[%s1 + $0x18] sm:$0xff]
  %v372 = vld [vmem:[%s1 + $0x20] sm:$0xff]
  %v373 = vld [vmem:[%s1 + $0x28] sm:$0xff]
  %v374 = vld [vmem:[%s1 + $0x30] sm:$0xff]
  %v375 = vld [vmem:[%s1 + $0x38] sm:$0xff]
  %v376 = vld [vmem:[%s1 + $0x40] sm:$0xff]
  %v377 = vld [vmem:[%s1 + $0x48] sm:$0xff]
  %v378 = vld [vmem:[%s1 + $0x50] sm:$0xff]
  %v379 = vld [vmem:[%s1 + $0x58] sm:$0xff]
  %v380 = vld [vmem:[%s1 + $0x60] sm:$0xff]
  %v381 = vld [vmem:[%s1 + $0x68] sm:$0xff]
  %v382 = vld [vmem:[%s1 + $0x70] sm:$0xff]
  %v383 = vld [vmem:[%s1 + $0x78] sm:$0xff]
  %v384 = vld [vmem:[%s1 + $0x80] sm:$0xff]
  %v385 = vld [vmem:[%s1 + $0x88] sm:$0xff]
  %v386 = vld [vmem:[%s1 + $0x90] sm:$0xff]
  %v387 = vld [vmem:[%s1 + $0x98] sm:$0xff]
  %v388 = vld [vmem:[%s1 + $0xa0] sm:$0xff]
  %v389 = vld [vmem:[%s1 + $0xa8] sm:$0xff]
  %v390 = vld [vmem:[%s1 + $0xb0] sm:$0xff]
  %v391 = vld [vmem:[%s1 + $0xb8] sm:$0xff]
  %v392 = vld [vmem:[%s1 + $0xc0] sm:$0xff]
  %v393 = vld [vmem:[%s1 + $0xc8] sm:$0xff]
  %v394 = vld [vmem:[%s1 + $0xd0] sm:$0xff]
  %v395 = vld [vmem:[%s1 + $0xd8] sm:$0xff]
  %v396 = vld [vmem:[%s1 + $0xe0] sm:$0xff]
  %v397 = vld [vmem:[%s1 + $0xe8] sm:$0xff]
  %v398 = vld [vmem:[%s1 + $0xf0] sm:$0xff]
  %v399 = vld [vmem:[%s1 + $0xf8] sm:$0xff]
  %v400 = vld [vmem:[%s2] sm:$0x1]
  %v402 = vlaneseq
  %v403 = vshrl.u32 %v402, 7
  %v404 = vsub.s32 0, %v403
  %v405 = vrot.slane %v400, %v404
  %vm423 = vcmask 1041409
  %v424 = vsel %vm423, %v198, %v172
  %vm425 = vcmask 1042434
  %v426 = vsel %vm425, %v224, %v424
  %vm427 = vcmask 1043459
  %v428 = vsel %vm427, %v250, %v426
  %vm429 = vcmask 1044484
  %v430 = vsel %vm429, %v276, %v428
  %vm431 = vcmask 1045509
  %v432 = vsel %vm431, %v302, %v430
  %vm433 = vcmask 1046534
  %v434 = vsel %vm433, %v328, %v432
  %vm435 = vcmask 1047559
  %v436 = vsel %vm435, %v354, %v434
  %v437 = vsel %vm423, %v211, %v185
  %v438 = vsel %vm425, %v237, %v437
  %v439 = vsel %vm427, %v263, %v438
  %v440 = vsel %vm429, %v289, %v439
  %v441 = vsel %vm431, %v315, %v440
  %v442 = vsel %vm433, %v341, %v441
  %v443 = vsel %vm435, %v367, %v442
  %446 = vmatprep.subr.mxu0 0.0
  %447 = vmatpush1.msra.mxu0 %v368
  %448 = vmatprep.subr.mxu0 0.0
  %449 = vmatpush1.msra.mxu0 %v369
  %450 = vmatprep.subr.mxu0 0.0
  %451 = vmatpush1.msra.mxu0 %v370
  %452 = vmatprep.subr.mxu0 0.0
  %453 = vmatpush1.msra.mxu0 %v371
  %454 = vmatprep.subr.mxu0 0.0
  %455 = vmatpush1.msra.mxu0 %v372
  %456 = vmatprep.subr.mxu0 0.0
  %457 = vmatpush1.msra.mxu0 %v373
  %458 = vmatprep.subr.mxu0 0.0
  %459 = vmatpush1.msra.mxu0 %v374
  %460 = vmatprep.subr.mxu0 0.0
  %461 = vmatpush1.msra.mxu0 %v375
  %462 = vmatprep.subr.mxu0 0.0
  %463 = vmatpush1.msra.mxu0 %v376
  %464 = vmatprep.subr.mxu0 0.0
  %465 = vmatpush1.msra.mxu0 %v377
  %466 = vmatprep.subr.mxu0 0.0
  %467 = vmatpush1.msra.mxu0 %v378
  %468 = vmatprep.subr.mxu0 0.0
  %469 = vmatpush1.msra.mxu0 %v379
  %470 = vmatprep.subr.mxu0 0.0
  %471 = vmatpush1.msra.mxu0 %v380
  %472 = vmatprep.subr.mxu0 0.0
  %473 = vmatpush1.msra.mxu0 %v381
  %474 = vmatprep.subr.mxu0 0.0
  %475 = vmatpush1.msra.mxu0 %v382
  %476 = vmatprep.subr.mxu0 0.0
  %477 = vmatpush1.msra.mxu0 %v383
  %478 = vmatprep.subr.mxu0 0.0
  %479 = vmatpush1.msra.mxu0 %v384
  %480 = vmatprep.subr.mxu0 0.0
  %481 = vmatpush1.msra.mxu0 %v385
  %482 = vmatprep.subr.mxu0 0.0
  %483 = vmatpush1.msra.mxu0 %v386
  %484 = vmatprep.subr.mxu0 0.0
  %485 = vmatpush1.msra.mxu0 %v387
  %486 = vmatprep.subr.mxu0 0.0
  %487 = vmatpush1.msra.mxu0 %v388
  %488 = vmatprep.subr.mxu0 0.0
  %489 = vmatpush1.msra.mxu0 %v389
  %490 = vmatprep.subr.mxu0 0.0
  %491 = vmatpush1.msra.mxu0 %v390
  %492 = vmatprep.subr.mxu0 0.0
  %493 = vmatpush1.msra.mxu0 %v391
  %494 = vmatprep.subr.mxu0 0.0
  %495 = vmatpush1.msra.mxu0 %v392
  %496 = vmatprep.subr.mxu0 0.0
  %497 = vmatpush1.msra.mxu0 %v393
  %498 = vmatprep.subr.mxu0 0.0
  %499 = vmatpush1.msra.mxu0 %v394
  %500 = vmatprep.subr.mxu0 0.0
  %501 = vmatpush1.msra.mxu0 %v395
  %502 = vmatprep.subr.mxu0 0.0
  %503 = vmatpush1.msra.mxu0 %v396
  %504 = vmatprep.subr.mxu0 0.0
  %505 = vmatpush1.msra.mxu0 %v397
  %506 = vmatprep.subr.mxu0 0.0
  %507 = vmatpush1.msra.mxu0 %v398
  %508 = vmatprep.subr.mxu0 0.0
  %509 = vmatpush1.msra.mxu0 %v399
  %510 = vmatprep.mubr.f32.mxu0 %v443
  %511 = vmatmul.mubr.f32.gmra.mrb[0].mxu0 %v436
  %v512 = vpop.f32.mrb[0].mxu0
  %v513 = vadd.f32 %v405, %v512
  %v514 = vpop.f32.mrb[0].mxu0
  %515 = vdwg.mxu0
  %v516 = vmax.f32 %v513, 0.0
  %v517 = vld [vmem:[%s3] sm:$0xff]
  %v518 = vld [vmem:[%s3 + $0x8] sm:$0xff]
  %v519 = vld [vmem:[%s3 + $0x10] sm:$0xff]
  %v520 = vld [vmem:[%s3 + $0x18] sm:$0xff]
  %v521 = vld [vmem:[%s3 + $0x20] sm:$0xff]
  %v522 = vld [vmem:[%s3 + $0x28] sm:$0xff]
  %v523 = vld [vmem:[%s3 + $0x30] sm:$0xff]
  %v524 = vld [vmem:[%s3 + $0x38] sm:$0xff]
  %v525 = vld [vmem:[%s3 + $0x40] sm:$0xff]
  %v526 = vld [vmem:[%s3 + $0x48] sm:$0xff]
  %v527 = vld [vmem:[%s3 + $0x50] sm:$0xff]
  %v528 = vld [vmem:[%s3 + $0x58] sm:$0xff]
  %v529 = vld [vmem:[%s3 + $0x60] sm:$0xff]
  %v530 = vld [vmem:[%s3 + $0x68] sm:$0xff]
  %v531 = vld [vmem:[%s3 + $0x70] sm:$0xff]
  %v532 = vld [vmem:[%s3 + $0x78] sm:$0xff]
  %v533 = vld [vmem:[%s4] sm:$0x1]
  %v535 = vlaneseq
  %v536 = vshrl.u32 %v535, 7
  %v537 = vsub.s32 0, %v536
  %v538 = vrot.slane %v533, %v537
  %540 = vmatprep.subr.mxu0 0.0
  %541 = vmatpush1.msra.mxu0 %v517
  %542 = vmatprep.subr.mxu0 0.0
  %543 = vmatpush1.msra.mxu0 %v518
  %544 = vmatprep.subr.mxu0 0.0
  %545 = vmatpush1.msra.mxu0 %v519
  %546 = vmatprep.subr.mxu0 0.0
  %547 = vmatpush1.msra.mxu0 %v520
  %548 = vmatprep.subr.mxu0 0.0
  %549 = vmatpush1.msra.mxu0 %v521
  %550 = vmatprep.subr.mxu0 0.0
  %551 = vmatpush1.msra.mxu0 %v522
  %552 = vmatprep.subr.mxu0 0.0
  %553 = vmatpush1.msra.mxu0 %v523
  %554 = vmatprep.subr.mxu0 0.0
  %555 = vmatpush1.msra.mxu0 %v524
  %556 = vmatprep.subr.mxu0 0.0
  %557 = vmatpush1.msra.mxu0 %v525
  %558 = vmatprep.subr.mxu0 0.0
  %559 = vmatpush1.msra.mxu0 %v526
  %560 = vmatprep.subr.mxu0 0.0
  %561 = vmatpush1.msra.mxu0 %v527
  %562 = vmatprep.subr.mxu0 0.0
  %563 = vmatpush1.msra.mxu0 %v528
  %564 = vmatprep.subr.mxu0 0.0
  %565 = vmatpush1.msra.mxu0 %v529
  %566 = vmatprep.subr.mxu0 0.0
  %567 = vmatpush1.msra.mxu0 %v530
  %568 = vmatprep.subr.mxu0 0.0
  %569 = vmatpush1.msra.mxu0 %v531
  %570 = vmatprep.subr.mxu0 0.0
  %571 = vmatpush1.msra.mxu0 %v532
  %572 = vmatprep.subr.mxu0 0.0
  %573 = vmatpush1.msra.mxu0 0.0
  %574 = vmatprep.subr.mxu0 0.0
  %575 = vmatpush1.msra.mxu0 0.0
  %576 = vmatprep.subr.mxu0 0.0
  %577 = vmatpush1.msra.mxu0 0.0
  %578 = vmatprep.subr.mxu0 0.0
  %579 = vmatpush1.msra.mxu0 0.0
  %580 = vmatprep.subr.mxu0 0.0
  %581 = vmatpush1.msra.mxu0 0.0
  %582 = vmatprep.subr.mxu0 0.0
  %583 = vmatpush1.msra.mxu0 0.0
  %584 = vmatprep.subr.mxu0 0.0
  %585 = vmatpush1.msra.mxu0 0.0
  %586 = vmatprep.subr.mxu0 0.0
  %587 = vmatpush1.msra.mxu0 0.0
  %588 = vmatprep.subr.mxu0 0.0
  %589 = vmatpush1.msra.mxu0 0.0
  %590 = vmatprep.subr.mxu0 0.0
  %591 = vmatpush1.msra.mxu0 0.0
  %592 = vmatprep.subr.mxu0 0.0
  %593 = vmatpush1.msra.mxu0 0.0
  %594 = vmatprep.subr.mxu0 0.0
  %595 = vmatpush1.msra.mxu0 0.0
  %596 = vmatprep.subr.mxu0 0.0
  %597 = vmatpush1.msra.mxu0 0.0
  %598 = vmatprep.subr.mxu0 0.0
  %599 = vmatpush1.msra.mxu0 0.0
  %600 = vmatprep.subr.mxu0 0.0
  %601 = vmatpush1.msra.mxu0 0.0
  %602 = vmatprep.subr.mxu0 0.0
  %603 = vmatpush1.msra.mxu0 0.0
  %604 = vmatprep.mubr.f32.mxu0 0.0
  %605 = vmatmul.mubr.f32.gmra.mrb[0].mxu0 %v516
  %v606 = vpop.f32.mrb[0].mxu0
  %v607 = vadd.f32 %v538, %v606
  %v608 = vpop.f32.mrb[0].mxu0
  %609 = vdwg.mxu0
  %v610 = vmax.f32 %v607, 0.0
  %v611 = vld [vmem:[%s5] sm:$0xff]
  %v612 = vld [vmem:[%s5 + $0x8] sm:$0xff]
  %v613 = vld [vmem:[%s5 + $0x10] sm:$0xff]
  %v614 = vld [vmem:[%s5 + $0x18] sm:$0xff]
  %v615 = vld [vmem:[%s5 + $0x20] sm:$0xff]
  %v616 = vld [vmem:[%s5 + $0x28] sm:$0xff]
  %v617 = vld [vmem:[%s5 + $0x30] sm:$0xff]
  %v618 = vld [vmem:[%s5 + $0x38] sm:$0xff]
  %v619 = vld [vmem:[%s5 + $0x40] sm:$0xff]
  %v620 = vld [vmem:[%s5 + $0x48] sm:$0xff]
  %v621 = vld [vmem:[%s5 + $0x50] sm:$0xff]
  %v622 = vld [vmem:[%s5 + $0x58] sm:$0xff]
  %v623 = vld [vmem:[%s5 + $0x60] sm:$0xff]
  %v624 = vld [vmem:[%s5 + $0x68] sm:$0xff]
  %v625 = vld [vmem:[%s5 + $0x70] sm:$0xff]
  %v626 = vld [vmem:[%s5 + $0x78] sm:$0xff]
  %v627 = vld [vmem:[%s6] sm:$0x1]
  %v629 = vlaneseq
  %v630 = vshrl.u32 %v629, 7
  %v631 = vsub.s32 0, %v630
  %v632 = vrot.slane %v627, %v631
  %634 = vmatprep.subr.mxu0 0.0
  %635 = vmatpush1.msra.mxu0 %v611
  %636 = vmatprep.subr.mxu0 0.0
  %637 = vmatpush1.msra.mxu0 %v612
  %638 = vmatprep.subr.mxu0 0.0
  %639 = vmatpush1.msra.mxu0 %v613
  %640 = vmatprep.subr.mxu0 0.0
  %641 = vmatpush1.msra.mxu0 %v614
  %642 = vmatprep.subr.mxu0 0.0
  %643 = vmatpush1.msra.mxu0 %v615
  %644 = vmatprep.subr.mxu0 0.0
  %645 = vmatpush1.msra.mxu0 %v616
  %646 = vmatprep.subr.mxu0 0.0
  %647 = vmatpush1.msra.mxu0 %v617
  %648 = vmatprep.subr.mxu0 0.0
  %649 = vmatpush1.msra.mxu0 %v618
  %650 = vmatprep.subr.mxu0 0.0
  %651 = vmatpush1.msra.mxu0 %v619
  %652 = vmatprep.subr.mxu0 0.0
  %653 = vmatpush1.msra.mxu0 %v620
  %654 = vmatprep.subr.mxu0 0.0
  %655 = vmatpush1.msra.mxu0 %v621
  %656 = vmatprep.subr.mxu0 0.0
  %657 = vmatpush1.msra.mxu0 %v622
  %658 = vmatprep.subr.mxu0 0.0
  %659 = vmatpush1.msra.mxu0 %v623
  %660 = vmatprep.subr.mxu0 0.0
  %661 = vmatpush1.msra.mxu0 %v624
  %662 = vmatprep.subr.mxu0 0.0
  %663 = vmatpush1.msra.mxu0 %v625
  %664 = vmatprep.subr.mxu0 0.0
  %665 = vmatpush1.msra.mxu0 %v626
  %666 = vmatprep.subr.mxu0 0.0
  %667 = vmatpush1.msra.mxu0 0.0
  %668 = vmatprep.subr.mxu0 0.0
  %669 = vmatpush1.msra.mxu0 0.0
  %670 = vmatprep.subr.mxu0 0.0
  %671 = vmatpush1.msra.mxu0 0.0
  %672 = vmatprep.subr.mxu0 0.0
  %673 = vmatpush1.msra.mxu0 0.0
  %674 = vmatprep.subr.mxu0 0.0
  %675 = vmatpush1.msra.mxu0 0.0
  %676 = vmatprep.subr.mxu0 0.0
  %677 = vmatpush1.msra.mxu0 0.0
  %678 = vmatprep.subr.mxu0 0.0
  %679 = vmatpush1.msra.mxu0 0.0
  %680 = vmatprep.subr.mxu0 0.0
  %681 = vmatpush1.msra.mxu0 0.0
  %682 = vmatprep.subr.mxu0 0.0
  %683 = vmatpush1.msra.mxu0 0.0
  %684 = vmatprep.subr.mxu0 0.0
  %685 = vmatpush1.msra.mxu0 0.0
  %686 = vmatprep.subr.mxu0 0.0
  %687 = vmatpush1.msra.mxu0 0.0
  %688 = vmatprep.subr.mxu0 0.0
  %689 = vmatpush1.msra.mxu0 0.0
  %690 = vmatprep.subr.mxu0 0.0
  %691 = vmatpush1.msra.mxu0 0.0
  %692 = vmatprep.subr.mxu0 0.0
  %693 = vmatpush1.msra.mxu0 0.0
  %694 = vmatprep.subr.mxu0 0.0
  %695 = vmatpush1.msra.mxu0 0.0
  %696 = vmatprep.subr.mxu0 0.0
  %697 = vmatpush1.msra.mxu0 0.0
  %698 = vmatprep.mubr.f32.mxu0 0.0
  %699 = vmatmul.mubr.f32.gmra.mrb[0].mxu0 %v610
  %v700 = vpop.f32.mrb[0].mxu0
  %v701 = vadd.f32 %v632, %v700
  %v702 = vpop.f32.mrb[0].mxu0
  %703 = vdwg.mxu0
  %v704 = vmax.f32 %v701, 0.0
  %v705 = vld [vmem:[%s7] sm:$0xff]
  %v706 = vld [vmem:[%s7 + $0x8] sm:$0xff]
  %v707 = vld [vmem:[%s7 + $0x10] sm:$0xff]
  %v708 = vld [vmem:[%s7 + $0x18] sm:$0xff]
  %v709 = vld [vmem:[%s7 + $0x20] sm:$0xff]
  %v710 = vld [vmem:[%s7 + $0x28] sm:$0xff]
  %v711 = vld [vmem:[%s7 + $0x30] sm:$0xff]
  %v712 = vld [vmem:[%s7 + $0x38] sm:$0xff]
  %v713 = vld [vmem:[%s7 + $0x40] sm:$0xff]
  %v714 = vld [vmem:[%s7 + $0x48] sm:$0xff]
  %v715 = vld [vmem:[%s7 + $0x50] sm:$0xff]
  %v716 = vld [vmem:[%s7 + $0x58] sm:$0xff]
  %v717 = vld [vmem:[%s7 + $0x60] sm:$0xff]
  %v718 = vld [vmem:[%s7 + $0x68] sm:$0xff]
  %v719 = vld [vmem:[%s7 + $0x70] sm:$0xff]
  %v720 = vld [vmem:[%s7 + $0x78] sm:$0xff]
  %v721 = vld [vmem:[%s8] sm:$0x1]
  %v723 = vlaneseq
  %v724 = vshrl.u32 %v723, 7
  %v725 = vsub.s32 0, %v724
  %v726 = vrot.slane %v721, %v725
  %728 = vmatprep.subr.mxu0 0.0
  %729 = vmatpush1.msra.mxu0 %v705
  %730 = vmatprep.subr.mxu0 0.0
  %731 = vmatpush1.msra.mxu0 %v706
  %732 = vmatprep.subr.mxu0 0.0
  %733 = vmatpush1.msra.mxu0 %v707
  %734 = vmatprep.subr.mxu0 0.0
  %735 = vmatpush1.msra.mxu0 %v708
  %736 = vmatprep.subr.mxu0 0.0
  %737 = vmatpush1.msra.mxu0 %v709
  %738 = vmatprep.subr.mxu0 0.0
  %739 = vmatpush1.msra.mxu0 %v710
  %740 = vmatprep.subr.mxu0 0.0
  %741 = vmatpush1.msra.mxu0 %v711
  %742 = vmatprep.subr.mxu0 0.0
  %743 = vmatpush1.msra.mxu0 %v712
  %744 = vmatprep.subr.mxu0 0.0
  %745 = vmatpush1.msra.mxu0 %v713
  %746 = vmatprep.subr.mxu0 0.0
  %747 = vmatpush1.msra.mxu0 %v714
  %748 = vmatprep.subr.mxu0 0.0
  %749 = vmatpush1.msra.mxu0 %v715
  %750 = vmatprep.subr.mxu0 0.0
  %751 = vmatpush1.msra.mxu0 %v716
  %752 = vmatprep.subr.mxu0 0.0
  %753 = vmatpush1.msra.mxu0 %v717
  %754 = vmatprep.subr.mxu0 0.0
  %755 = vmatpush1.msra.mxu0 %v718
  %756 = vmatprep.subr.mxu0 0.0
  %757 = vmatpush1.msra.mxu0 %v719
  %758 = vmatprep.subr.mxu0 0.0
  %759 = vmatpush1.msra.mxu0 %v720
  %760 = vmatprep.subr.mxu0 0.0
  %761 = vmatpush1.msra.mxu0 0.0
  %762 = vmatprep.subr.mxu0 0.0
  %763 = vmatpush1.msra.mxu0 0.0
  %764 = vmatprep.subr.mxu0 0.0
  %765 = vmatpush1.msra.mxu0 0.0
  %766 = vmatprep.subr.mxu0 0.0
  %767 = vmatpush1.msra.mxu0 0.0
  %768 = vmatprep.subr.mxu0 0.0
  %769 = vmatpush1.msra.mxu0 0.0
  %770 = vmatprep.subr.mxu0 0.0
  %771 = vmatpush1.msra.mxu0 0.0
  %772 = vmatprep.subr.mxu0 0.0
  %773 = vmatpush1.msra.mxu0 0.0
  %774 = vmatprep.subr.mxu0 0.0
  %775 = vmatpush1.msra.mxu0 0.0
  %776 = vmatprep.subr.mxu0 0.0
  %777 = vmatpush1.msra.mxu0 0.0
  %778 = vmatprep.subr.mxu0 0.0
  %779 = vmatpush1.msra.mxu0 0.0
  %780 = vmatprep.subr.mxu0 0.0
  %781 = vmatpush1.msra.mxu0 0.0
  %782 = vmatprep.subr.mxu0 0.0
  %783 = vmatpush1.msra.mxu0 0.0
  %784 = vmatprep.subr.mxu0 0.0
  %785 = vmatpush1.msra.mxu0 0.0
  %786 = vmatprep.subr.mxu0 0.0
  %787 = vmatpush1.msra.mxu0 0.0
  %788 = vmatprep.subr.mxu0 0.0
  %789 = vmatpush1.msra.mxu0 0.0
  %790 = vmatprep.subr.mxu0 0.0
  %791 = vmatpush1.msra.mxu0 0.0
  %792 = vmatprep.mubr.f32.mxu0 0.0
  %793 = vmatmul.mubr.f32.gmra.mrb[0].mxu0 %v704
  %v794 = vpop.f32.mrb[0].mxu0
  %v795 = vadd.f32 %v726, %v794
  %v796 = vpop.f32.mrb[0].mxu0
  %797 = vdwg.mxu0
  %798 = vst [vmem:[%s9] sm:$0xff] %v795
  // Predicated region
  $region38: #{decoder_mlp_forward.1} parent=0 // pred_check
    _
  $region39: #{decoder_mlp_forward.1} parent=0 // pred_check_branch
    %800 = sbr.rel (0) target = $region41
  $region40: #{decoder_mlp_forward.1} parent=0 // pred_region
    _
  $region41: #{decoder_mlp_forward.1} parent=0 // pred_fallthru
    _
  // Predicated region
  $region42: #{decoder_mlp_forward.1} parent=0 // pred_check
    _
  $region43: #{decoder_mlp_forward.1} parent=0 // pred_check_branch
    %802 = sbr.rel (0) target = $region45
  $region44: #{decoder_mlp_forward.1} parent=0 // pred_region
    _
  $region45: #{decoder_mlp_forward.1} parent=0 // pred_fallthru
    _

</llo_original>
